<compile_context>
chip_gen: v7x
topology: tpu7x:2x2x1
jax: 0.10.0
libtpu: 0.0.40
codegen_flags: <defaults>
</compile_context>

<pallas_src>
import functools

import jax
import jax.numpy as jnp
from jax import lax
from jax.experimental import pallas as pl
from jax.experimental.pallas import tpu as pltpu


def _round_up(x, m):
    return ((x + m - 1) // m) * m


def _pick_tile(n, tn):
    """Tokens per grid step: multiple of 8, and >= 2 grid blocks when possible
    so the 'parallel' grid axis can split across v7x's 2 TensorCores."""
    tn = min(tn, max(8, _round_up((n + 1) // 2, 8)))
    return _round_up(tn, 8)


def _parallel_embed_kernel(ids_ref, bounds_ref, w_hbm, y_ref, out_ref, sem,
                           *, tn, unroll):
    """One grid step gathers up to `tn` embedding rows via row DMAs.

    ids_ref    : (N_pad,)  int32 SMEM   global token ids (scalar prefetch)
    bounds_ref : (2,)      int32 SMEM   [vocab_start, vocab_end] (scalar prefetch)
    w_hbm      : (Vp, D)   float HBM    rank-local weight shard (never in VMEM)
    y_ref      : (tn, D)   float VMEM   running accumulator block (input)
    out_ref    : (tn, D)   float VMEM   output block
    sem        : ()        shared DMA semaphore
    """
    base = pl.program_id(0) * tn
    vs = bounds_ref[0]
    ve = bounds_ref[1]

    # 1) Seed the whole block with the running accumulation (zeros on rank 0).
    #    Rows owned by this rank carry 0 from every other rank, so overwriting
    #    them below is exactly the all_reduce sum.  This full-tile store must
    #    stay ahead of every DMA .start() below.
    out_ref[...] = y_ref[...]

    # 2) Issue one row DMA per in-partition token (shared semaphore) and count
    #    the issued copies.  All SMEM id reads happen here, before any wait.
    def issue(t, nvalid):
        tok = ids_ref[base + t]
        valid = jnp.logical_and(tok >= vs, tok < ve)
        local = jnp.where(valid, tok - vs, 0)

        @pl.when(valid)
        def _():
            pltpu.make_async_copy(
                w_hbm.at[pl.ds(local, 1), :],
                out_ref.at[pl.ds(t, 1), :],
                sem,
            ).start()

        return nvalid + valid.astype(jnp.int32)

    nvalid = lax.fori_loop(0, tn, issue, jnp.int32(0), unroll=unroll)

    # 3) Drain: every row copy has the identical (1, D) size, so waiting with a
    #    same-shaped descriptor on the shared semaphore `nvalid` times matches
    #    the completion count of the copies issued above.  The descriptor's
    #    src/dst are only used for the transfer size, never dereferenced.
    @pl.loop(0, nvalid)
    def _drain(_):
        pltpu.make_async_copy(
            w_hbm.at[pl.ds(0, 1), :],
            out_ref.at[pl.ds(0, 1), :],
            sem,
        ).wait()


def parallel_embedding_rank(ids_pad, y_pad, weight, vocab_start_idx,
                            vocab_end_idx, *, tn, unroll=8):
    """Per-rank ParallelEmbedding forward, accumulating into `y_pad`.

    ids_pad : (N_pad,)   int32 global token ids (pad sentinel = -1)
    y_pad   : (N_pad, D) running accumulation over ranks processed so far
    weight  : (Vp, D)    rank-local shard (stays in HBM)
    returns : (N_pad, D) = y_pad with this rank's rows filled in.
    """
    n_pad = ids_pad.shape[0]
    _, d = weight.shape
    assert n_pad % tn == 0
    bounds = jnp.array([vocab_start_idx, vocab_end_idx], dtype=jnp.int32)

    # Double-buffered (tn, D) input + output blocks; raise the scoped-VMEM
    # limit only when they would not fit the smallest (v5e, 16 MiB) default.
    itemsize = jnp.dtype(weight.dtype).itemsize
    buf_bytes = 4 * tn * d * itemsize
    vmem_limit = int(buf_bytes + (8 << 20)) if buf_bytes > (12 << 20) else None

    kernel = functools.partial(_parallel_embed_kernel, tn=tn,
                               unroll=max(1, min(unroll, tn)))

    # TODO(synk): for bf16/fp8 tables, bitcast the shard to a (Vp, D//2) uint32
    # view with pltpu.bitcast so each row DMA is a full 32-bit sublane write.
    return pl.pallas_call(
        kernel,
        out_shape=jax.ShapeDtypeStruct((n_pad, d), weight.dtype),
        grid_spec=pltpu.PrefetchScalarGridSpec(
            num_scalar_prefetch=2,                       # ids + [vs, ve] -> SMEM
            grid=(n_pad // tn,),
            in_specs=[
                pl.BlockSpec(memory_space=pl.ANY),       # weight shard stays in HBM
                pl.BlockSpec((tn, d), lambda i, ids, bounds: (i, 0)),  # accumulator in
            ],
            out_specs=pl.BlockSpec((tn, d), lambda i, ids, bounds: (i, 0)),
            scratch_shapes=[pltpu.SemaphoreType.DMA(())],  # one shared DMA sem
        ),
        compiler_params=pltpu.CompilerParams(
            dimension_semantics=("parallel",),
            vmem_limit_bytes=vmem_limit),
    )(ids_pad, bounds, weight, y_pad)


def parallel_embedding_forward(x, full_weight, world_size, *, tn=128):
    """Full ParallelEmbedding.forward, simulating the tensor-parallel group.

    x           : (batch, seq) int32 token ids
    full_weight : (vocab_size, dim) -- sliced into per-rank shards
    """
    vocab_size, dim = full_weight.shape
    part_vocab = vocab_size // world_size
    ids = x.reshape(-1).astype(jnp.int32)
    n = ids.shape[0]

    tile = _pick_tile(n, tn)
    n_pad = _round_up(n, tile)
    # Pad with -1, which is out of range for *every* rank, so pad rows stay 0.
    ids_pad = jnp.pad(ids, (0, n_pad - n), constant_values=-1)

    y = jnp.zeros((n_pad, dim), full_weight.dtype)
    # TODO(synk): on a real tensor-parallel mesh this loop is one kernel per
    # rank plus a ring all-reduce built from pltpu.make_async_remote_copy; the
    # single-device accumulation below (disjoint partitions -> overwrite ==
    # sum) is numerically identical and avoids extra (N, D) add passes.
    for rank in range(world_size):
        vs = rank * part_vocab
        ve = vs + part_vocab
        shard = lax.slice_in_dim(full_weight, vs, ve, axis=0)
        y = parallel_embedding_rank(ids_pad, y, shard, vs, ve, tn=tile)
    return y[:n].reshape(*x.shape, dim)


if __name__ == "__main__":
    key = jax.random.PRNGKey(0)
    wkey, xkey = jax.random.split(key)

    vocab_size, dim = 256, 128
    world_size = 2
    batch, seq = 2, 8

    # deterministic parameter init (stand-in for torch.empty + trained values)
    full_weight = jax.random.normal(wkey, (vocab_size, dim), dtype=jnp.float32)
    x = jax.random.randint(xkey, (batch, seq), 0, vocab_size, dtype=jnp.int32)

    y = parallel_embedding_forward(x, full_weight, world_size)
    y = jax.block_until_ready(y)

    # reference: plain embedding lookup over the full (unsharded) table
    ref = full_weight[x]
    assert y.shape == (batch, seq, dim)
    assert jnp.allclose(y, ref, atol=1e-6), "parallel embedding mismatch"

    print("KERNEL_OK")
</pallas_src>

<mosaic_0001>
module attributes {stable_mosaic.version = 11 : i64} {
  func.func @_parallel_embed_kernel(%arg0: i32, %arg1: memref<16xi32, #tpu.memory_space<smem>>, %arg2: memref<2xi32, #tpu.memory_space<smem>>, %arg3: memref<128x128xf32, #tpu.memory_space<any>>, %arg4: memref<8x128xf32, #tpu.memory_space<vmem>>, %arg5: memref<8x128xf32, #tpu.memory_space<vmem>>, %arg6: memref<!tpu.dma_semaphore, #tpu.memory_space<semaphore_mem>>) attributes {dimension_semantics = [#tpu.dimension_semantics<parallel>], iteration_bounds = array<i64: 2>, scalar_prefetch = 2 : i64, scratch_operands = 1 : i64, tpu.core_type = #tpu.core_type<tc>, window_params = [{}, {transform_indices = @transform_1, window_bounds = array<i64: 8, 128>}, {transform_indices = @transform_2, window_bounds = array<i64: 8, 128>}]} {
    %c8_i32 = arith.constant 8 : i32
    %0 = arith.muli %arg0, %c8_i32 : i32
    %c0 = arith.constant 0 : index
    %1 = memref.load %arg2[%c0] : memref<2xi32, #tpu.memory_space<smem>>
    %c1 = arith.constant 1 : index
    %2 = memref.load %arg2[%c1] : memref<2xi32, #tpu.memory_space<smem>>
    %c0_0 = arith.constant 0 : index
    %c0_1 = arith.constant 0 : index
    %3 = vector.load %arg4[%c0_0, %c0_1] : memref<8x128xf32, #tpu.memory_space<vmem>>, vector<8x128xf32>
    %c0_2 = arith.constant 0 : index
    %c0_3 = arith.constant 0 : index
    %4 = vector.load %arg5[%c0_2, %c0_3] : memref<8x128xf32, #tpu.memory_space<vmem>>, vector<8x128xf32>
    tpu.vector_store %arg5[%c0_2, %c0_3], %3 {strides = array<i32>} : memref<8x128xf32, #tpu.memory_space<vmem>>, vector<8x128xf32>,
    %c0_i32 = arith.constant 0 : i32
    %c0_i32_4 = arith.constant 0 : i32
    %5 = arith.addi %0, %c0_i32_4 : i32
    %6 = arith.index_cast %5 : i32 to index
    %7 = memref.load %arg1[%6] : memref<16xi32, #tpu.memory_space<smem>>
    %8 = arith.cmpi sge, %7, %1 : i32
    %9 = arith.cmpi slt, %7, %2 : i32
    %10 = arith.andi %8, %9 : i1
    %11 = arith.subi %7, %1 : i32
    %c0_i32_5 = arith.constant 0 : i32
    %12 = arith.select %10, %11, %c0_i32_5 : i32
    %13 = arith.extui %10 : i1 to i32
    %c0_i32_6 = arith.constant 0 : i32
    %14 = arith.cmpi ne, %13, %c0_i32_6 : i32
    scf.if %14 {
      %c0_i32_30 = arith.constant 0 : i32
      %107 = tpu.memref_slice %arg3[%12, %c0_i32_30] : memref<128x128xf32, #tpu.memory_space<any>> -> memref<1x128xf32, #tpu.memory_space<any>>
      %c0_i32_31 = arith.constant 0 : i32
      %108 = tpu.memref_slice %arg5[%c0_i32_4, %c0_i32_31] : memref<8x128xf32, #tpu.memory_space<vmem>> -> memref<1x128xf32, #tpu.memory_space<vmem>>
      tpu.enqueue_dma source(%107 : memref<1x128xf32, #tpu.memory_space<any>>) target(%108 : memref<1x128xf32, #tpu.memory_space<vmem>>) target_semaphore(%arg6 : memref<!tpu.dma_semaphore, #tpu.memory_space<semaphore_mem>>)
    } else {
    }
    %15 = arith.extui %10 : i1 to i32
    %16 = arith.addi %c0_i32, %15 : i32
    %c1_i32 = arith.constant 1 : i32
    %17 = arith.addi %0, %c1_i32 : i32
    %18 = arith.index_cast %17 : i32 to index
    %19 = memref.load %arg1[%18] : memref<16xi32, #tpu.memory_space<smem>>
    %20 = arith.cmpi sge, %19, %1 : i32
    %21 = arith.cmpi slt, %19, %2 : i32
    %22 = arith.andi %20, %21 : i1
    %23 = arith.subi %19, %1 : i32
    %c0_i32_7 = arith.constant 0 : i32
    %24 = arith.select %22, %23, %c0_i32_7 : i32
    %25 = arith.extui %22 : i1 to i32
    %c0_i32_8 = arith.constant 0 : i32
    %26 = arith.cmpi ne, %25, %c0_i32_8 : i32
    scf.if %26 {
      %c0_i32_30 = arith.constant 0 : i32
      %107 = tpu.memref_slice %arg3[%24, %c0_i32_30] : memref<128x128xf32, #tpu.memory_space<any>> -> memref<1x128xf32, #tpu.memory_space<any>>
      %c0_i32_31 = arith.constant 0 : i32
      %108 = tpu.memref_slice %arg5[%c1_i32, %c0_i32_31] : memref<8x128xf32, #tpu.memory_space<vmem>> -> memref<1x128xf32, #tpu.memory_space<vmem>>
      tpu.enqueue_dma source(%107 : memref<1x128xf32, #tpu.memory_space<any>>) target(%108 : memref<1x128xf32, #tpu.memory_space<vmem>>) target_semaphore(%arg6 : memref<!tpu.dma_semaphore, #tpu.memory_space<semaphore_mem>>)
    } else {
    }
    %27 = arith.extui %22 : i1 to i32
    %28 = arith.addi %16, %27 : i32
    %c2_i32 = arith.constant 2 : i32
    %29 = arith.addi %0, %c2_i32 : i32
    %30 = arith.index_cast %29 : i32 to index
    %31 = memref.load %arg1[%30] : memref<16xi32, #tpu.memory_space<smem>>
    %32 = arith.cmpi sge, %31, %1 : i32
    %33 = arith.cmpi slt, %31, %2 : i32
    %34 = arith.andi %32, %33 : i1
    %35 = arith.subi %31, %1 : i32
    %c0_i32_9 = arith.constant 0 : i32
    %36 = arith.select %34, %35, %c0_i32_9 : i32
    %37 = arith.extui %34 : i1 to i32
    %c0_i32_10 = arith.constant 0 : i32
    %38 = arith.cmpi ne, %37, %c0_i32_10 : i32
    scf.if %38 {
      %c0_i32_30 = arith.constant 0 : i32
      %107 = tpu.memref_slice %arg3[%36, %c0_i32_30] : memref<128x128xf32, #tpu.memory_space<any>> -> memref<1x128xf32, #tpu.memory_space<any>>
      %c0_i32_31 = arith.constant 0 : i32
      %108 = tpu.memref_slice %arg5[%c2_i32, %c0_i32_31] : memref<8x128xf32, #tpu.memory_space<vmem>> -> memref<1x128xf32, #tpu.memory_space<vmem>>
      tpu.enqueue_dma source(%107 : memref<1x128xf32, #tpu.memory_space<any>>) target(%108 : memref<1x128xf32, #tpu.memory_space<vmem>>) target_semaphore(%arg6 : memref<!tpu.dma_semaphore, #tpu.memory_space<semaphore_mem>>)
    } else {
    }
    %39 = arith.extui %34 : i1 to i32
    %40 = arith.addi %28, %39 : i32
    %c3_i32 = arith.constant 3 : i32
    %41 = arith.addi %0, %c3_i32 : i32
    %42 = arith.index_cast %41 : i32 to index
    %43 = memref.load %arg1[%42] : memref<16xi32, #tpu.memory_space<smem>>
    %44 = arith.cmpi sge, %43, %1 : i32
    %45 = arith.cmpi slt, %43, %2 : i32
    %46 = arith.andi %44, %45 : i1
    %47 = arith.subi %43, %1 : i32
    %c0_i32_11 = arith.constant 0 : i32
    %48 = arith.select %46, %47, %c0_i32_11 : i32
    %49 = arith.extui %46 : i1 to i32
    %c0_i32_12 = arith.constant 0 : i32
    %50 = arith.cmpi ne, %49, %c0_i32_12 : i32
    scf.if %50 {
      %c0_i32_30 = arith.constant 0 : i32
      %107 = tpu.memref_slice %arg3[%48, %c0_i32_30] : memref<128x128xf32, #tpu.memory_space<any>> -> memref<1x128xf32, #tpu.memory_space<any>>
      %c0_i32_31 = arith.constant 0 : i32
      %108 = tpu.memref_slice %arg5[%c3_i32, %c0_i32_31] : memref<8x128xf32, #tpu.memory_space<vmem>> -> memref<1x128xf32, #tpu.memory_space<vmem>>
      tpu.enqueue_dma source(%107 : memref<1x128xf32, #tpu.memory_space<any>>) target(%108 : memref<1x128xf32, #tpu.memory_space<vmem>>) target_semaphore(%arg6 : memref<!tpu.dma_semaphore, #tpu.memory_space<semaphore_mem>>)
    } else {
    }
    %51 = arith.extui %46 : i1 to i32
    %52 = arith.addi %40, %51 : i32
    %c4_i32 = arith.constant 4 : i32
    %53 = arith.addi %0, %c4_i32 : i32
    %54 = arith.index_cast %53 : i32 to index
    %55 = memref.load %arg1[%54] : memref<16xi32, #tpu.memory_space<smem>>
    %56 = arith.cmpi sge, %55, %1 : i32
    %57 = arith.cmpi slt, %55, %2 : i32
    %58 = arith.andi %56, %57 : i1
    %59 = arith.subi %55, %1 : i32
    %c0_i32_13 = arith.constant 0 : i32
    %60 = arith.select %58, %59, %c0_i32_13 : i32
    %61 = arith.extui %58 : i1 to i32
    %c0_i32_14 = arith.constant 0 : i32
    %62 = arith.cmpi ne, %61, %c0_i32_14 : i32
    scf.if %62 {
      %c0_i32_30 = arith.constant 0 : i32
      %107 = tpu.memref_slice %arg3[%60, %c0_i32_30] : memref<128x128xf32, #tpu.memory_space<any>> -> memref<1x128xf32, #tpu.memory_space<any>>
      %c0_i32_31 = arith.constant 0 : i32
      %108 = tpu.memref_slice %arg5[%c4_i32, %c0_i32_31] : memref<8x128xf32, #tpu.memory_space<vmem>> -> memref<1x128xf32, #tpu.memory_space<vmem>>
      tpu.enqueue_dma source(%107 : memref<1x128xf32, #tpu.memory_space<any>>) target(%108 : memref<1x128xf32, #tpu.memory_space<vmem>>) target_semaphore(%arg6 : memref<!tpu.dma_semaphore, #tpu.memory_space<semaphore_mem>>)
    } else {
    }
    %63 = arith.extui %58 : i1 to i32
    %64 = arith.addi %52, %63 : i32
    %c5_i32 = arith.constant 5 : i32
    %65 = arith.addi %0, %c5_i32 : i32
    %66 = arith.index_cast %65 : i32 to index
    %67 = memref.load %arg1[%66] : memref<16xi32, #tpu.memory_space<smem>>
    %68 = arith.cmpi sge, %67, %1 : i32
    %69 = arith.cmpi slt, %67, %2 : i32
    %70 = arith.andi %68, %69 : i1
    %71 = arith.subi %67, %1 : i32
    %c0_i32_15 = arith.constant 0 : i32
    %72 = arith.select %70, %71, %c0_i32_15 : i32
    %73 = arith.extui %70 : i1 to i32
    %c0_i32_16 = arith.constant 0 : i32
    %74 = arith.cmpi ne, %73, %c0_i32_16 : i32
    scf.if %74 {
      %c0_i32_30 = arith.constant 0 : i32
      %107 = tpu.memref_slice %arg3[%72, %c0_i32_30] : memref<128x128xf32, #tpu.memory_space<any>> -> memref<1x128xf32, #tpu.memory_space<any>>
      %c0_i32_31 = arith.constant 0 : i32
      %108 = tpu.memref_slice %arg5[%c5_i32, %c0_i32_31] : memref<8x128xf32, #tpu.memory_space<vmem>> -> memref<1x128xf32, #tpu.memory_space<vmem>>
      tpu.enqueue_dma source(%107 : memref<1x128xf32, #tpu.memory_space<any>>) target(%108 : memref<1x128xf32, #tpu.memory_space<vmem>>) target_semaphore(%arg6 : memref<!tpu.dma_semaphore, #tpu.memory_space<semaphore_mem>>)
    } else {
    }
    %75 = arith.extui %70 : i1 to i32
    %76 = arith.addi %64, %75 : i32
    %c6_i32 = arith.constant 6 : i32
    %77 = arith.addi %0, %c6_i32 : i32
    %78 = arith.index_cast %77 : i32 to index
    %79 = memref.load %arg1[%78] : memref<16xi32, #tpu.memory_space<smem>>
    %80 = arith.cmpi sge, %79, %1 : i32
    %81 = arith.cmpi slt, %79, %2 : i32
    %82 = arith.andi %80, %81 : i1
    %83 = arith.subi %79, %1 : i32
    %c0_i32_17 = arith.constant 0 : i32
    %84 = arith.select %82, %83, %c0_i32_17 : i32
    %85 = arith.extui %82 : i1 to i32
    %c0_i32_18 = arith.constant 0 : i32
    %86 = arith.cmpi ne, %85, %c0_i32_18 : i32
    scf.if %86 {
      %c0_i32_30 = arith.constant 0 : i32
      %107 = tpu.memref_slice %arg3[%84, %c0_i32_30] : memref<128x128xf32, #tpu.memory_space<any>> -> memref<1x128xf32, #tpu.memory_space<any>>
      %c0_i32_31 = arith.constant 0 : i32
      %108 = tpu.memref_slice %arg5[%c6_i32, %c0_i32_31] : memref<8x128xf32, #tpu.memory_space<vmem>> -> memref<1x128xf32, #tpu.memory_space<vmem>>
      tpu.enqueue_dma source(%107 : memref<1x128xf32, #tpu.memory_space<any>>) target(%108 : memref<1x128xf32, #tpu.memory_space<vmem>>) target_semaphore(%arg6 : memref<!tpu.dma_semaphore, #tpu.memory_space<semaphore_mem>>)
    } else {
    }
    %87 = arith.extui %82 : i1 to i32
    %88 = arith.addi %76, %87 : i32
    %c7_i32 = arith.constant 7 : i32
    %89 = arith.addi %0, %c7_i32 : i32
    %90 = arith.index_cast %89 : i32 to index
    %91 = memref.load %arg1[%90] : memref<16xi32, #tpu.memory_space<smem>>
    %92 = arith.cmpi sge, %91, %1 : i32
    %93 = arith.cmpi slt, %91, %2 : i32
    %94 = arith.andi %92, %93 : i1
    %95 = arith.subi %91, %1 : i32
    %c0_i32_19 = arith.constant 0 : i32
    %96 = arith.select %94, %95, %c0_i32_19 : i32
    %97 = arith.extui %94 : i1 to i32
    %c0_i32_20 = arith.constant 0 : i32
    %98 = arith.cmpi ne, %97, %c0_i32_20 : i32
    scf.if %98 {
      %c0_i32_30 = arith.constant 0 : i32
      %107 = tpu.memref_slice %arg3[%96, %c0_i32_30] : memref<128x128xf32, #tpu.memory_space<any>> -> memref<1x128xf32, #tpu.memory_space<any>>
      %c0_i32_31 = arith.constant 0 : i32
      %108 = tpu.memref_slice %arg5[%c7_i32, %c0_i32_31] : memref<8x128xf32, #tpu.memory_space<vmem>> -> memref<1x128xf32, #tpu.memory_space<vmem>>
      tpu.enqueue_dma source(%107 : memref<1x128xf32, #tpu.memory_space<any>>) target(%108 : memref<1x128xf32, #tpu.memory_space<vmem>>) target_semaphore(%arg6 : memref<!tpu.dma_semaphore, #tpu.memory_space<semaphore_mem>>)
    } else {
    }
    %99 = arith.extui %94 : i1 to i32
    %100 = arith.addi %88, %99 : i32
    %c8_i32_21 = arith.constant 8 : i32
    %c0_i32_22 = arith.constant 0 : i32
    %101 = arith.subi %100, %c0_i32_22 : i32
    %c1_i32_23 = arith.constant 1 : i32
    %c1_i32_24 = arith.constant 1 : i32
    %102 = arith.subi %c1_i32_23, %c1_i32_24 : i32
    %103 = arith.addi %101, %102 : i32
    %c1_i32_25 = arith.constant 1 : i32
    %104 = arith.divsi %103, %c1_i32_25 : i32
    %c1_i32_26 = arith.constant 1 : i32
    %c0_i32_27 = arith.constant 0 : i32
    %c0_i32_28 = arith.constant 0 : i32
    %105 = arith.subi %104, %c0_i32_28 : i32
    %106 = arith.addi %c0_i32_28, %105 : i32
    %c1_i32_29 = arith.constant 1 : i32
    scf.for %arg7 = %c0_i32_28 to %106 step %c1_i32_29  : i32 {
      %107 = arith.muli %arg7, %c1_i32_26 : i32
      %108 = arith.addi %c0_i32_27, %107 : i32
      %c0_i32_30 = arith.constant 0 : i32
      %c0_i32_31 = arith.constant 0 : i32
      %109 = tpu.memref_slice %arg3[%c0_i32_30, %c0_i32_31] : memref<128x128xf32, #tpu.memory_space<any>> -> memref<1x128xf32, #tpu.memory_space<any>>
      %c0_i32_32 = arith.constant 0 : i32
      %c0_i32_33 = arith.constant 0 : i32
      %110 = tpu.memref_slice %arg5[%c0_i32_32, %c0_i32_33] : memref<8x128xf32, #tpu.memory_space<vmem>> -> memref<1x128xf32, #tpu.memory_space<vmem>>
      tpu.wait_dma2 semaphore(%arg6 : memref<!tpu.dma_semaphore, #tpu.memory_space<semaphore_mem>>) src(%109 : memref<1x128xf32, #tpu.memory_space<any>>) dst(%110 : memref<1x128xf32, #tpu.memory_space<vmem>>)
    }
    return
  }
  func.func @transform_1(%arg0: i32, %arg1: memref<16xi32, #tpu.memory_space<smem>>, %arg2: memref<2xi32, #tpu.memory_space<smem>>) -> (i32, i32) {
    %c0_i32 = arith.constant 0 : i32
    %c0_i32_0 = arith.constant 0 : i32
    return %arg0, %c0_i32 : i32, i32
  }
  func.func @transform_2(%arg0: i32, %arg1: memref<16xi32, #tpu.memory_space<smem>>, %arg2: memref<2xi32, #tpu.memory_space<smem>>) -> (i32, i32) {
    %c0_i32 = arith.constant 0 : i32
    %c0_i32_0 = arith.constant 0 : i32
    return %arg0, %c0_i32 : i32, i32
  }
}

</mosaic_0001>

<llo_original>
// kernel: tpu_custom_call.1
$region0: #{tpu_custom_call.1}
  #allocation0 [shape = 'u32[]', space=smem, size = 0x4, offset = 0x4, fixed_abs, tag = 'smem constant byte address 0x4 - core index']
  #allocation1 [shape = 'u32[144,128]{1,0:T(1,128)}', space=vmem, size = 0x12000, scoped, tag = 'internal scratch']
  #allocation2 [shape = 's32[1]{0}', space=sflag, size = 0x4, scoped, tag = 'scratch operand']
  #allocation3 [shape = 's32[1]{0}', space=sflag, size = 0x4, scoped, tag = 'scoped memory for tpu_custom_call.1']
  #allocation4 [shape = 'u8[512]{0}', space=smem, size = 0x200, scoped, tag = 'prefetched SMEM operand 0']
  #allocation5 [shape = 'u8[512]{0}', space=smem, size = 0x200, scoped, tag = 'prefetched SMEM operand 1']
  #allocation10 [shape = 's32[]', space=sflag, size = 0x4, offset = 0, fixed_abs, tag = 'sflag constant byte address 0x0 - dummy sync flag']
  #allocation11 [shape = 's32[]', space=sflag, size = 0x4, offset = 0, fixed_abs, tag = 'sflag constant byte address 0x0 - dummy sync flag']
  #allocation12 [shape = 'u32[]', space=smem, size = 0x4, offset = 0x44, fixed_abs, tag = 'smem constant byte address 0x44 - assertion arg 0']
  #allocation13 [shape = 'u32[]', space=smem, size = 0x4, offset = 0x48, fixed_abs, tag = 'smem constant byte address 0x48 - assertion arg 1']
  #allocation14 [shape = 's32[]', space=sflag, size = 0x4, offset = 0, fixed_abs, tag = 'sflag constant byte address 0x0 - dummy sync flag']
  #allocation15 [shape = 's32[]', space=sflag, size = 0x4, offset = 0, fixed_abs, tag = 'sflag constant byte address 0x0 - dummy sync flag']
  #allocation16 [shape = 's32[]', space=sflag, size = 0x4, offset = 0, fixed_abs, tag = 'sflag constant byte address 0x0 - dummy sync flag']
  #allocation17 [shape = 's32[]', space=sflag, size = 0x4, offset = 0, fixed_abs, tag = 'sflag constant byte address 0x0 - dummy sync flag']
  #allocation18 [shape = 's32[]', space=sflag, size = 0x4, offset = 0, fixed_abs, tag = 'sflag constant byte address 0x0 - dummy sync flag']
  #allocation19 [shape = 's32[]', space=sflag, size = 0x4, offset = 0, fixed_abs, tag = 'sflag constant byte address 0x0 - dummy sync flag']
  #allocation20 [shape = 's32[]', space=sflag, size = 0x4, offset = 0, fixed_abs, tag = 'sflag constant byte address 0x0 - dummy sync flag']
  #allocation21 [shape = 's32[]', space=sflag, size = 0x4, offset = 0, fixed_abs, tag = 'sflag constant byte address 0x0 - dummy sync flag']
  #allocation22 [shape = 's32[]', space=sflag, size = 0x4, offset = 0, fixed_abs, tag = 'sflag constant byte address 0x0 - dummy sync flag']
  #allocation23 [shape = 's32[]', space=sflag, size = 0x4, offset = 0, fixed_abs, tag = 'sflag constant byte address 0x0 - dummy sync flag']
  #allocation24 [shape = 's32[]', space=sflag, size = 0x4, offset = 0, fixed_abs, tag = 'sflag constant byte address 0x0 - dummy sync flag']
  #allocation25 [shape = 's32[]', space=sflag, size = 0x4, offset = 0, fixed_abs, tag = 'sflag constant byte address 0x0 - dummy sync flag']
  #allocation26 [shape = 's32[]', space=sflag, size = 0x4, offset = 0, fixed_abs, tag = 'sflag constant byte address 0x0 - dummy sync flag']
  #allocation27 [shape = 's32[]', space=sflag, size = 0x4, offset = 0, fixed_abs, tag = 'sflag constant byte address 0x0 - dummy sync flag']
  %s0 = inlined_call_operand.hbm [shape: s32[16], index: 0, kind: input, shape index: {}]
  %s1 = inlined_call_operand.vmem [shape: s32[2], index: 1, kind: input, shape index: {}]
  %s2 = inlined_call_operand.hbm [shape: f32[128,128], index: 2, kind: input, shape index: {}]
  %s3 = inlined_call_operand.hbm [shape: f32[16,128], index: 3, kind: input, shape index: {}]
  %s4 = inlined_call_operand.hbm [shape: f32[16,128], index: 4, kind: output, shape index: {}]
  %s5 = sld [smem:[#allocation0]]
  $region112: #{tpu_custom_call.1} parent=0
    _
  %s7 = ssub.s32 1, %s5
  %s8 = scalar_select 0, %s7, %s5
  %10 = dma.hbm_to_smem %s0, 16, [#allocation4], [#allocation3]
  %s11 = sshll.u32 %s1, 4
  %s12 = int_to_ptr.vmem [resolvable:$true] %s11
  %14 = dma.vmem_to_smem %s12, 16, [#allocation5], [#allocation3]
  %15 = dma.done [#allocation3], 32
  %16 = sfence
  $region1: #{tpu_custom_call.1} parent=0
    #allocation6 [shape = 'u8[8192]{0}', space=vmem, size = 0x2000, scoped, tag = 'input window, operand 3']
    #allocation7 [shape = 's32[2]{0}', space=sflag, size = 0x8, scoped, tag = 'scoped memory for tpu_custom_call.1']
    #allocation8 [shape = 's32[2]{0}', space=sflag, size = 0x8, scoped, tag = 'scoped memory for tpu_custom_call.1']
    #allocation9 [shape = 'u8[8192]{0}', space=vmem, size = 0x2000, scoped, tag = 'output window, operand 0']
    %17 = vsyncpa [#allocation7], 0
    %s18 = scalar_lea.sflag [#allocation7], 1
    %19 = vsyncpa %s18, 0
    %20 = vsyncpa [#allocation8], 0
    %s21 = scalar_lea.sflag [#allocation8], 1
    %22 = vsyncpa %s21, 0
    loop: start=0, step=1, limit=4
    $region2: #{tpu_custom_call.1} parent=1 // loop_pre_header
      _
    $region3: #{tpu_custom_call.1} parent=1 // loop_header
      %s24 = sphi 0, %s28
      %p25 = scmp.ge.s32.totalorder %s24, 4
      %s34 = sphi 0, %s36
      %s37 = sphi 0, %s34
      %s38 = sphi 0, %s37
      %s54 = sphi 0, %s38
      %s60 = sphi 0, %s62
      %s63 = sphi 0, %s60
      %s64 = sphi 0, %s63
      %s80 = sphi 0, %s64
    $region4: #{tpu_custom_call.1} parent=1 // loop_header_branch
      %27 = sbr.rel (%p25) target = $region8
    $region5: #{tpu_custom_call.1} parent=1 // loop_body
      %s29 = ssub.s32 %s24, 1
      %s30 = ssub.s32 %s24, 2
      %s31 = sadd.s32 %s24, 1
      %s32 = ssub.s32 %s24, %s31
      %p33 = scmp.eq.s32.totalorder %s32, 0
      %s35 = sadd.s32 %s34, 1
      %s36 = scalar_select %p33, %s34, %s35
      %p39 = pneg %p33
      %p40 = scmp.eq.s32.totalorder %s24, 1
      %p41 = por %p39, %p40
      %p42 = scmp.ne.s32.totalorder %s34, %s37
      %p43 = scmp.eq.s32.totalorder %s24, 0
      %p44 = por %p42, %p43
      %p45 = scmp.ne.s32.totalorder %s34, %s37
      %p46 = scmp.eq.s32.totalorder %s29, 1
      %p47 = por %p45, %p46
      %p48 = scmp.ne.s32.totalorder %s37, %s38
      %p49 = scmp.eq.s32.totalorder %s29, 0
      %p50 = por %p48, %p49
      %p51 = scmp.ne.s32.totalorder %s37, %s38
      %p52 = scmp.eq.s32.totalorder %s30, 1
      %p53 = por %p51, %p52
      %p55 = scmp.ne.s32.totalorder %s38, %s54
      %p56 = scmp.eq.s32.totalorder %s30, 0
      %p57 = por %p55, %p56
      %s58 = ssub.s32 %s24, %s31
      %p59 = scmp.eq.s32.totalorder %s58, 0
      %s61 = sadd.s32 %s60, 1
      %s62 = scalar_select %p59, %s60, %s61
      %p65 = pneg %p59
      %p66 = scmp.eq.s32.totalorder %s24, 1
      %p67 = por %p65, %p66
      %p68 = scmp.ne.s32.totalorder %s60, %s63
      %p69 = scmp.eq.s32.totalorder %s24, 0
      %p70 = por %p68, %p69
      %p71 = scmp.ne.s32.totalorder %s60, %s63
      %p72 = scmp.eq.s32.totalorder %s29, 1
      %p73 = por %p71, %p72
      %p74 = scmp.ne.s32.totalorder %s63, %s64
      %p75 = scmp.eq.s32.totalorder %s29, 0
      %p76 = por %p74, %p75
      %p77 = scmp.ne.s32.totalorder %s63, %s64
      %p78 = scmp.eq.s32.totalorder %s30, 1
      %p79 = por %p77, %p78
      %p81 = scmp.ne.s32.totalorder %s64, %s80
      %p82 = scmp.eq.s32.totalorder %s30, 0
      %p83 = por %p81, %p82
      %p84 = scmp.le.s32.totalorder 1, %s24
      %p85 = scmp.lt.s32.totalorder %s24, 3
      %p86 = pnand %p84, %p85
      %p87 = pneg %p86
      // Predicated region
      $region9: #{tpu_custom_call.1} parent=5 // pred_check
        _
      $region10: #{tpu_custom_call.1} parent=5 // pred_check_branch
        %89 = sbr.rel (%p86) target = $region12
      $region11: #{tpu_custom_call.1} parent=5 // pred_region
        %s90 = ssub.s32 %s24, 1
      $region12: #{tpu_custom_call.1} parent=5 // pred_fallthru
        _
      %p91 = scmp.lt.s32.totalorder %s24, 2
      // Predicated region
      $region13: #{tpu_custom_call.1} parent=5 // pred_check
        %p92 = pneg %p91
      $region14: #{tpu_custom_call.1} parent=5 // pred_check_branch
        %94 = sbr.rel (%p92) target = $region16
      $region15: #{tpu_custom_call.1} parent=5 // pred_region
        // Predicated region
        $region17: #{tpu_custom_call.1} parent=15 // pred_check
          %p95 = pneg %p44
        $region18: #{tpu_custom_call.1} parent=15 // pred_check_branch
          %97 = sbr.rel (%p95) target = $region20
        $region19: #{tpu_custom_call.1} parent=15 // pred_region
          %s98 = sand.u32 %s34, 1
          %s99 = scalar_lea.sflag [#allocation7], %s98
          %s100 = sand.u32 %s34, 1
          %s101 = smul.addr %s100, 8
          %s102 = scalar_lea.vmem [#allocation6], %s101
          %s104 = ssub.s32 128, 128
          %105 = vsyncadd %s99, %s104
          %s106 = smul.addr %s24, 128
          %s107 = scalar_lea.hbm %s3, %s106
          %s109 = sshll.u32 %s102, 4
          %s110 = int_to_ptr.vmem [resolvable:$true] %s109
          %112 = dma.hbm_to_vmem [thread:$0]  %s107, 128, %s110, %s99
        $region20: #{tpu_custom_call.1} parent=15 // pred_fallthru
          _
      $region16: #{tpu_custom_call.1} parent=5 // pred_fallthru
        _
      %p113 = scmp.le.s32.totalorder 1, %s24
      %p114 = scmp.lt.s32.totalorder %s24, 3
      %p115 = pnand %p113, %p114
      %p116 = pneg %p115
      // Predicated region
      $region21: #{tpu_custom_call.1} parent=5 // pred_check
        _
      $region22: #{tpu_custom_call.1} parent=5 // pred_check_branch
        %118 = sbr.rel (%p115) target = $region24
      $region23: #{tpu_custom_call.1} parent=5 // pred_region
        %s119 = ssub.s32 %s24, 1
        %s120 = sand.u32 %s37, 1
        %s121 = scalar_lea.sflag [#allocation7], %s120
        %s122 = sand.u32 %s37, 1
        %s123 = smul.addr %s122, 8
        %s124 = scalar_lea.vmem [#allocation6], %s123
        // Predicated region
        $region25: #{tpu_custom_call.1} parent=23 // pred_check
          %p125 = pneg %p50
        $region26: #{tpu_custom_call.1} parent=23 // pred_check_branch
          %127 = sbr.rel (%p125) target = $region28
        $region27: #{tpu_custom_call.1} parent=23 // pred_region
          %128 = dma.done %s121, 128
        $region28: #{tpu_custom_call.1} parent=23 // pred_fallthru
          _
        %s129 = sand.u32 %s37, 1
        %s130 = scalar_lea.sflag [#allocation7], %s129
        %s131 = sand.u32 %s37, 1
        %s132 = smul.addr %s131, 8
        %s133 = scalar_lea.vmem [#allocation6], %s132
        %p134 = pneg %p50
        %p135 = pneg %p47
        %p136 = pneg %p76
        %p137 = pneg %p73
        %s138 = sand.u32 %s63, 1
        %s139 = scalar_lea.sflag [#allocation8], %s138
        %s140 = sand.u32 %s63, 1
        %s141 = smul.addr %s140, 8
        %s142 = scalar_lea.vmem [#allocation9], %s141
        %s143 = smul.u32 %s29, 8
        %s144 = sld [smem:[#allocation5]]
        %s145 = sld [smem:[#allocation5 + $0x1]]
        %v146 = vld [vmem:[%s124] sm:$0xff]
        %147 = vst [vmem:[%s142] sm:$0xff] %v146
        %s148 = sld [smem:[#allocation4 + %s143]]
        %p149 = scmp.ge.s32.totalorder %s148, %s144
        %p150 = scmp.lt.s32.totalorder %s148, %s145
        %p151 = pnand %p149, %p150
        %p152 = pneg %p151
        %s153 = ssub.s32 %s148, %s144
        %s154 = scalar_select %p152, %s153, 0
        // Predicated region
        $region29: #{tpu_custom_call.1} parent=23 // pred_check
          _
        $region30: #{tpu_custom_call.1} parent=23 // pred_check_branch
          %156 = sbr.rel (%p151) target = $region32
        $region31: #{tpu_custom_call.1} parent=23 // pred_region
          %s157 = smul.addr %s154, 16
          %s158 = scalar_lea.hbm %s2, %s157
          // Predicated region
          $region33: #{tpu_custom_call.1} parent=31 // pred_check
            _
          $region34: #{tpu_custom_call.1} parent=31 // pred_check_branch
            %160 = sbr.rel target = $region36
          $region35: #{tpu_custom_call.1} parent=31 // pred_region
            %161 = sst [smem:[#allocation12]] [#allocation11]
            %162 = sst [smem:[#allocation13]] [#allocation10]
          $region36: #{tpu_custom_call.1} parent=31 // pred_fallthru
            _
          %164 = shalt.err (0)
          %s166 = sshll.u32 %s142, 4
          %s167 = int_to_ptr.vmem [resolvable:$true] %s166
          %169 = dma.hbm_to_vmem [thread:$0]  %s158, 16, %s167, [#allocation2]
        $region32: #{tpu_custom_call.1} parent=23 // pred_fallthru
          _
        %s170 = scalar_select %p152, 1, 0
        %s171 = sadd.s32 %s143, 1
        %s172 = sld [smem:[#allocation4 + %s171]]
        %p173 = scmp.ge.s32.totalorder %s172, %s144
        %p174 = scmp.lt.s32.totalorder %s172, %s145
        %p175 = pnand %p173, %p174
        %p176 = pneg %p175
        %s177 = ssub.s32 %s172, %s144
        %s178 = scalar_select %p176, %s177, 0
        // Predicated region
        $region37: #{tpu_custom_call.1} parent=23 // pred_check
          _
        $region38: #{tpu_custom_call.1} parent=23 // pred_check_branch
          %180 = sbr.rel (%p175) target = $region40
        $region39: #{tpu_custom_call.1} parent=23 // pred_region
          %s181 = smul.addr %s178, 16
          %s182 = scalar_lea.hbm %s2, %s181
          %s183 = scalar_lea.vmem %s142, 1 [#allocation9]
          // Predicated region
          $region41: #{tpu_custom_call.1} parent=39 // pred_check
            _
          $region42: #{tpu_custom_call.1} parent=39 // pred_check_branch
            %185 = sbr.rel target = $region44
          $region43: #{tpu_custom_call.1} parent=39 // pred_region
            %186 = sst [smem:[#allocation12]] [#allocation15]
            %187 = sst [smem:[#allocation13]] [#allocation14]
          $region44: #{tpu_custom_call.1} parent=39 // pred_fallthru
            _
          %189 = shalt.err (0)
          %s191 = sshll.u32 %s183, 4
          %s192 = int_to_ptr.vmem [resolvable:$true] %s191
          %194 = dma.hbm_to_vmem [thread:$0]  %s182, 16, %s192, [#allocation2]
        $region40: #{tpu_custom_call.1} parent=23 // pred_fallthru
          _
        %s195 = scalar_select %p176, 1, 0
        %s196 = sadd.s32 %s170, %s195
        %s197 = sadd.s32 %s143, 2
        %s198 = sld [smem:[#allocation4 + %s197]]
        %p199 = scmp.ge.s32.totalorder %s198, %s144
        %p200 = scmp.lt.s32.totalorder %s198, %s145
        %p201 = pnand %p199, %p200
        %p202 = pneg %p201
        %s203 = ssub.s32 %s198, %s144
        %s204 = scalar_select %p202, %s203, 0
        // Predicated region
        $region45: #{tpu_custom_call.1} parent=23 // pred_check
          _
        $region46: #{tpu_custom_call.1} parent=23 // pred_check_branch
          %206 = sbr.rel (%p201) target = $region48
        $region47: #{tpu_custom_call.1} parent=23 // pred_region
          %s207 = smul.addr %s204, 16
          %s208 = scalar_lea.hbm %s2, %s207
          %s209 = scalar_lea.vmem %s142, 2 [#allocation9]
          // Predicated region
          $region49: #{tpu_custom_call.1} parent=47 // pred_check
            _
          $region50: #{tpu_custom_call.1} parent=47 // pred_check_branch
            %211 = sbr.rel target = $region52
          $region51: #{tpu_custom_call.1} parent=47 // pred_region
            %212 = sst [smem:[#allocation12]] [#allocation17]
            %213 = sst [smem:[#allocation13]] [#allocation16]
          $region52: #{tpu_custom_call.1} parent=47 // pred_fallthru
            _
          %215 = shalt.err (0)
          %s217 = sshll.u32 %s209, 4
          %s218 = int_to_ptr.vmem [resolvable:$true] %s217
          %220 = dma.hbm_to_vmem [thread:$0]  %s208, 16, %s218, [#allocation2]
        $region48: #{tpu_custom_call.1} parent=23 // pred_fallthru
          _
        %s221 = scalar_select %p202, 1, 0
        %s222 = sadd.s32 %s196, %s221
        %s223 = sadd.s32 %s143, 3
        %s224 = sld [smem:[#allocation4 + %s223]]
        %p225 = scmp.ge.s32.totalorder %s224, %s144
        %p226 = scmp.lt.s32.totalorder %s224, %s145
        %p227 = pnand %p225, %p226
        %p228 = pneg %p227
        %s229 = ssub.s32 %s224, %s144
        %s230 = scalar_select %p228, %s229, 0
        // Predicated region
        $region53: #{tpu_custom_call.1} parent=23 // pred_check
          _
        $region54: #{tpu_custom_call.1} parent=23 // pred_check_branch
          %232 = sbr.rel (%p227) target = $region56
        $region55: #{tpu_custom_call.1} parent=23 // pred_region
          %s233 = smul.addr %s230, 16
          %s234 = scalar_lea.hbm %s2, %s233
          %s235 = scalar_lea.vmem %s142, 3 [#allocation9]
          // Predicated region
          $region57: #{tpu_custom_call.1} parent=55 // pred_check
            _
          $region58: #{tpu_custom_call.1} parent=55 // pred_check_branch
            %237 = sbr.rel target = $region60
          $region59: #{tpu_custom_call.1} parent=55 // pred_region
            %238 = sst [smem:[#allocation12]] [#allocation19]
            %239 = sst [smem:[#allocation13]] [#allocation18]
          $region60: #{tpu_custom_call.1} parent=55 // pred_fallthru
            _
          %241 = shalt.err (0)
          %s243 = sshll.u32 %s235, 4
          %s244 = int_to_ptr.vmem [resolvable:$true] %s243
          %246 = dma.hbm_to_vmem [thread:$0]  %s234, 16, %s244, [#allocation2]
        $region56: #{tpu_custom_call.1} parent=23 // pred_fallthru
          _
        %s247 = scalar_select %p228, 1, 0
        %s248 = sadd.s32 %s222, %s247
        %s249 = sadd.s32 %s143, 4
        %s250 = sld [smem:[#allocation4 + %s249]]
        %p251 = scmp.ge.s32.totalorder %s250, %s144
        %p252 = scmp.lt.s32.totalorder %s250, %s145
        %p253 = pnand %p251, %p252
        %p254 = pneg %p253
        %s255 = ssub.s32 %s250, %s144
        %s256 = scalar_select %p254, %s255, 0
        // Predicated region
        $region61: #{tpu_custom_call.1} parent=23 // pred_check
          _
        $region62: #{tpu_custom_call.1} parent=23 // pred_check_branch
          %258 = sbr.rel (%p253) target = $region64
        $region63: #{tpu_custom_call.1} parent=23 // pred_region
          %s259 = smul.addr %s256, 16
          %s260 = scalar_lea.hbm %s2, %s259
          %s261 = scalar_lea.vmem %s142, 4 [#allocation9]
          // Predicated region
          $region65: #{tpu_custom_call.1} parent=63 // pred_check
            _
          $region66: #{tpu_custom_call.1} parent=63 // pred_check_branch
            %263 = sbr.rel target = $region68
          $region67: #{tpu_custom_call.1} parent=63 // pred_region
            %264 = sst [smem:[#allocation12]] [#allocation21]
            %265 = sst [smem:[#allocation13]] [#allocation20]
          $region68: #{tpu_custom_call.1} parent=63 // pred_fallthru
            _
          %267 = shalt.err (0)
          %s269 = sshll.u32 %s261, 4
          %s270 = int_to_ptr.vmem [resolvable:$true] %s269
          %272 = dma.hbm_to_vmem [thread:$0]  %s260, 16, %s270, [#allocation2]
        $region64: #{tpu_custom_call.1} parent=23 // pred_fallthru
          _
        %s273 = scalar_select %p254, 1, 0
        %s274 = sadd.s32 %s248, %s273
        %s275 = sadd.s32 %s143, 5
        %s276 = sld [smem:[#allocation4 + %s275]]
        %p277 = scmp.ge.s32.totalorder %s276, %s144
        %p278 = scmp.lt.s32.totalorder %s276, %s145
        %p279 = pnand %p277, %p278
        %p280 = pneg %p279
        %s281 = ssub.s32 %s276, %s144
        %s282 = scalar_select %p280, %s281, 0
        // Predicated region
        $region69: #{tpu_custom_call.1} parent=23 // pred_check
          _
        $region70: #{tpu_custom_call.1} parent=23 // pred_check_branch
          %284 = sbr.rel (%p279) target = $region72
        $region71: #{tpu_custom_call.1} parent=23 // pred_region
          %s285 = smul.addr %s282, 16
          %s286 = scalar_lea.hbm %s2, %s285
          %s287 = scalar_lea.vmem %s142, 5 [#allocation9]
          // Predicated region
          $region73: #{tpu_custom_call.1} parent=71 // pred_check
            _
          $region74: #{tpu_custom_call.1} parent=71 // pred_check_branch
            %289 = sbr.rel target = $region76
          $region75: #{tpu_custom_call.1} parent=71 // pred_region
            %290 = sst [smem:[#allocation12]] [#allocation23]
            %291 = sst [smem:[#allocation13]] [#allocation22]
          $region76: #{tpu_custom_call.1} parent=71 // pred_fallthru
            _
          %293 = shalt.err (0)
          %s295 = sshll.u32 %s287, 4
          %s296 = int_to_ptr.vmem [resolvable:$true] %s295
          %298 = dma.hbm_to_vmem [thread:$0]  %s286, 16, %s296, [#allocation2]
        $region72: #{tpu_custom_call.1} parent=23 // pred_fallthru
          _
        %s299 = scalar_select %p280, 1, 0
        %s300 = sadd.s32 %s274, %s299
        %s301 = sadd.s32 %s143, 6
        %s302 = sld [smem:[#allocation4 + %s301]]
        %p303 = scmp.ge.s32.totalorder %s302, %s144
        %p304 = scmp.lt.s32.totalorder %s302, %s145
        %p305 = pnand %p303, %p304
        %p306 = pneg %p305
        %s307 = ssub.s32 %s302, %s144
        %s308 = scalar_select %p306, %s307, 0
        // Predicated region
        $region77: #{tpu_custom_call.1} parent=23 // pred_check
          _
        $region78: #{tpu_custom_call.1} parent=23 // pred_check_branch
          %310 = sbr.rel (%p305) target = $region80
        $region79: #{tpu_custom_call.1} parent=23 // pred_region
          %s311 = smul.addr %s308, 16
          %s312 = scalar_lea.hbm %s2, %s311
          %s313 = scalar_lea.vmem %s142, 6 [#allocation9]
          // Predicated region
          $region81: #{tpu_custom_call.1} parent=79 // pred_check
            _
          $region82: #{tpu_custom_call.1} parent=79 // pred_check_branch
            %315 = sbr.rel target = $region84
          $region83: #{tpu_custom_call.1} parent=79 // pred_region
            %316 = sst [smem:[#allocation12]] [#allocation25]
            %317 = sst [smem:[#allocation13]] [#allocation24]
          $region84: #{tpu_custom_call.1} parent=79 // pred_fallthru
            _
          %319 = shalt.err (0)
          %s321 = sshll.u32 %s313, 4
          %s322 = int_to_ptr.vmem [resolvable:$true] %s321
          %324 = dma.hbm_to_vmem [thread:$0]  %s312, 16, %s322, [#allocation2]
        $region80: #{tpu_custom_call.1} parent=23 // pred_fallthru
          _
        %s325 = scalar_select %p306, 1, 0
        %s326 = sadd.s32 %s300, %s325
        %s327 = sadd.s32 %s143, 7
        %s328 = sld [smem:[#allocation4 + %s327]]
        %p329 = scmp.ge.s32.totalorder %s328, %s144
        %p330 = scmp.lt.s32.totalorder %s328, %s145
        %p331 = pnand %p329, %p330
        %p332 = pneg %p331
        %s333 = ssub.s32 %s328, %s144
        %s334 = scalar_select %p332, %s333, 0
        // Predicated region
        $region85: #{tpu_custom_call.1} parent=23 // pred_check
          _
        $region86: #{tpu_custom_call.1} parent=23 // pred_check_branch
          %336 = sbr.rel (%p331) target = $region88
        $region87: #{tpu_custom_call.1} parent=23 // pred_region
          %s337 = smul.addr %s334, 16
          %s338 = scalar_lea.hbm %s2, %s337
          %s339 = scalar_lea.vmem %s142, 7 [#allocation9]
          // Predicated region
          $region89: #{tpu_custom_call.1} parent=87 // pred_check
            _
          $region90: #{tpu_custom_call.1} parent=87 // pred_check_branch
            %341 = sbr.rel target = $region92
          $region91: #{tpu_custom_call.1} parent=87 // pred_region
            %342 = sst [smem:[#allocation12]] [#allocation27]
            %343 = sst [smem:[#allocation13]] [#allocation26]
          $region92: #{tpu_custom_call.1} parent=87 // pred_fallthru
            _
          %345 = shalt.err (0)
          %s347 = sshll.u32 %s339, 4
          %s348 = int_to_ptr.vmem [resolvable:$true] %s347
          %350 = dma.hbm_to_vmem [thread:$0]  %s338, 16, %s348, [#allocation2]
        $region88: #{tpu_custom_call.1} parent=23 // pred_fallthru
          _
        %s351 = scalar_select %p332, 1, 0
        %s352 = sadd.s32 %s326, %s351
        // While loop
        $region93: #{tpu_custom_call.1} parent=23 // loop_pre_header
          _
        $region94: #{tpu_custom_call.1} parent=23 // loop_header
          %s354 = sphi 0, %s356
          %p355 = scmp.ge.s32.totalorder %s354, %s352
        $region95: #{tpu_custom_call.1} parent=23 // loop_header_branch
          %358 = sbr.rel (%p355) target = $region99
        $region96: #{tpu_custom_call.1} parent=23 // loop_body
          %s359 = smul.u32 1, 1
          %s360 = sshll.u32 %s359, 4
          %361 = dma.done [#allocation2], %s360
        $region97: #{tpu_custom_call.1} parent=23 // loop_footer
          %s356 = sadd.s32 %s354, 1
        $region98: #{tpu_custom_call.1} parent=23 // loop_footer_branch
          %353 = sbr.rel target = $region94
        $region99: #{tpu_custom_call.1} parent=23 // loop_exit
          _
        %s362 = sand.u32 %s63, 1
        %s363 = scalar_lea.sflag [#allocation8], %s362
        %s364 = sand.u32 %s63, 1
        %s365 = smul.addr %s364, 8
        %s366 = scalar_lea.vmem [#allocation9], %s365
        // Predicated region
        $region100: #{tpu_custom_call.1} parent=23 // pred_check
          %p367 = pneg %p73
        $region101: #{tpu_custom_call.1} parent=23 // pred_check_branch
          %369 = sbr.rel (%p367) target = $region103
        $region102: #{tpu_custom_call.1} parent=23 // pred_region
          %s371 = ssub.s32 128, 128
          %372 = vsyncadd %s363, %s371
          %s373 = smul.addr %s29, 128
          %s374 = scalar_lea.hbm %s4, %s373
          %s376 = sshll.u32 %s366, 4
          %s377 = int_to_ptr.vmem [resolvable:$true] %s376
          %379 = dma.vmem_to_hbm [thread:$0]  %s377, 128, %s374, %s363
        $region103: #{tpu_custom_call.1} parent=23 // pred_fallthru
          _
      $region24: #{tpu_custom_call.1} parent=5 // pred_fallthru
        _
      %p380 = scmp.le.s32.totalorder 2, %s24
      // Predicated region
      $region104: #{tpu_custom_call.1} parent=5 // pred_check
        %p381 = pneg %p380
      $region105: #{tpu_custom_call.1} parent=5 // pred_check_branch
        %383 = sbr.rel (%p381) target = $region107
      $region106: #{tpu_custom_call.1} parent=5 // pred_region
        %s384 = ssub.s32 %s24, 2
        // Predicated region
        $region108: #{tpu_custom_call.1} parent=106 // pred_check
          %p385 = pneg %p79
        $region109: #{tpu_custom_call.1} parent=106 // pred_check_branch
          %387 = sbr.rel (%p385) target = $region111
        $region110: #{tpu_custom_call.1} parent=106 // pred_region
          %s388 = sand.u32 %s64, 1
          %s389 = scalar_lea.sflag [#allocation8], %s388
          %s390 = sand.u32 %s64, 1
          %s391 = smul.addr %s390, 8
          %s392 = scalar_lea.vmem [#allocation9], %s391
          %393 = dma.done %s389, 128
        $region111: #{tpu_custom_call.1} parent=106 // pred_fallthru
          _
      $region107: #{tpu_custom_call.1} parent=5 // pred_fallthru
        _
    $region6: #{tpu_custom_call.1} parent=1 // loop_footer
      %s28 = sadd.s32 1, %s24
    $region7: #{tpu_custom_call.1} parent=1 // loop_footer_branch
      %23 = sbr.rel target = $region3
    $region8: #{tpu_custom_call.1} parent=1 // loop_exit
      _
    %394 = vsyncpa [#allocation7], 1
    %s395 = scalar_lea.sflag [#allocation7], 1
    %396 = vsyncpa %s395, 1
    %397 = vsyncpa [#allocation8], 1
    %s398 = scalar_lea.sflag [#allocation8], 1
    %399 = vsyncpa %s398, 1
  %400 = vsyncmov [#allocation2]
  %s401 = vpop.sfrf %400
  %p402 = scmp.eq.s32.totalorder %s401, 0
  %p403 = pneg %p402
  %405 = shalt.err (%p403)

</llo_original>
